<compile_context>
chip_gen: v5e
topology: v5e:2x2
jax: 0.10.0
libtpu: 0.0.40
codegen_flags: <defaults>
</compile_context>

<pallas_src>
import jax
import jax.numpy as jnp
from jax.experimental import pallas as pl
from jax.experimental.pallas import tpu as pltpu


def _round_up(x, m):
    return ((x + m - 1) // m) * m


def bail_mlp_kernel(x_ref, w1_ref, b1_ref, w2_ref, b2_ref, w3_ref, b3_ref, o_ref):
    # fc1 + ReLU  (bf16 MXU matmul, f32 accumulate, f32 VPU/EUP epilogue).
    x = x_ref[...].astype(jnp.bfloat16)  # identity if state already bf16
    h = jnp.dot(x, w1_ref[...], preferred_element_type=jnp.float32)
    h = jnp.maximum(h + b1_ref[...], 0.0)
    # fc2 + ReLU
    h = jnp.dot(h.astype(jnp.bfloat16), w2_ref[...],
                preferred_element_type=jnp.float32)
    h = jnp.maximum(h + b2_ref[...], 0.0)
    # fc3 + Tanh
    h = jnp.dot(h.astype(jnp.bfloat16), w3_ref[...],
                preferred_element_type=jnp.float32)
    # TODO(synk): optionally present a lane-dense output (reshape the logical
    # output to (B*action_dim//128, 128) in the wrapper + matching in-kernel
    # reshape) to replace masked vst.msk stores once B*action_dim is
    # 128-aligned; left narrow here for shape generality.
    o_ref[...] = jnp.tanh(h + b3_ref[...]).astype(o_ref.dtype)


def _vmem_limit_bytes():
    """Generation-aware scoped-VMEM request (~75% of physical, <= 100 MiB)."""
    cap = 64 * 1024 * 1024  # conservative default: v7x per-TC physical VMEM
    try:
        info = pltpu.get_tpu_info()
        cap = int(getattr(info, "vmem_capacity_bytes", cap))
    except Exception:
        pass
    return min((cap * 3) // 4, 100 * 1024 * 1024)


def _pick_batch_tile(B, per_row_bytes, weight_bytes, vmem_limit, block_b):
    """Largest batch tile that fits the VMEM budget, multiple of 256 (8 for tiny B)."""
    if B <= 256:
        return _round_up(max(B, 1), 8)
    budget = vmem_limit - weight_bytes - (2 << 20)          # 2 MiB slack
    tb = min(block_b, max(256, budget // per_row_bytes), 32768, _round_up(B, 256))
    # Keep >= 2 grid steps so v7x's two TensorCores both get work.
    tb = min(tb, _round_up(-(-B // 2), 256))
    return max(256, (tb // 256) * 256)


def bail_forward(state, params, *, block_b=32768):
    """state: (B, state_dim) f32 or bf16; params: (in,out) weights / (1,out) biases."""
    w1, b1 = params["w1"], params["b1"]
    w2, b2 = params["w2"], params["b2"]
    w3, b3 = params["w3"], params["b3"]

    # Params should already be bf16 weights / f32 biases (init_bail_params
    # stores them that way); only cast if a caller handed raw f32 params.
    w1, w2, w3 = (w if w.dtype == jnp.bfloat16 else w.astype(jnp.bfloat16)
                  for w in (w1, w2, w3))
    b1, b2, b3 = (b if b.dtype == jnp.float32 else b.astype(jnp.float32)
                  for b in (b1, b2, b3))

    B, state_dim = state.shape
    hidden_dim = w1.shape[1]
    action_dim = w3.shape[1]

    vmem_limit = _vmem_limit_bytes()
    # Per-row VMEM cost: double-buffered streamed in/out tiles plus f32+bf16
    # hidden-layer intermediates (x2 safety for compiler temporaries).
    per_row = (2 * state_dim * state.dtype.itemsize
               + 2 * action_dim * 4
               + hidden_dim * (4 + 2) * 2)
    weight_bytes = (2 * 2 * (w1.size + w2.size + w3.size)      # bf16, double-buffered
                    + 2 * 4 * (b1.size + b2.size + b3.size))   # f32, double-buffered
    TB = _pick_batch_tile(B, per_row, weight_bytes, vmem_limit, block_b)
    grid = (pl.cdiv(B, TB),)   # ragged last tile: partial read + masked write

    def batch_map(i):
        return (i, 0)

    def const_map(i):
        return (0, 0)

    in_specs = [
        pl.BlockSpec((TB, state_dim), batch_map),   # state: streamed batch tiles
        pl.BlockSpec(w1.shape, const_map),          # weights/biases: VMEM-resident
        pl.BlockSpec(b1.shape, const_map),
        pl.BlockSpec(w2.shape, const_map),
        pl.BlockSpec(b2.shape, const_map),
        pl.BlockSpec(w3.shape, const_map),
        pl.BlockSpec(b3.shape, const_map),
    ]
    out_spec = pl.BlockSpec((TB, action_dim), batch_map)

    flops = 2 * B * (state_dim * hidden_dim
                     + hidden_dim * hidden_dim
                     + hidden_dim * action_dim)
    bytes_accessed = (B * state_dim * state.dtype.itemsize     # streamed input
                      + B * action_dim * 4                     # streamed output
                      + 2 * (w1.size + w2.size + w3.size)      # bf16 weights (once)
                      + 4 * (b1.size + b2.size + b3.size))     # f32 biases (once)
    cost = pl.CostEstimate(flops=flops,
                           transcendentals=B * action_dim,     # tanh
                           bytes_accessed=bytes_accessed)

    return pl.pallas_call(
        bail_mlp_kernel,
        out_shape=jax.ShapeDtypeStruct((B, action_dim), jnp.float32),
        grid=grid,
        in_specs=in_specs,
        out_specs=out_spec,
        compiler_params=pltpu.CompilerParams(
            dimension_semantics=("parallel",),   # shard batch tiles across TCs (v7x)
            vmem_limit_bytes=vmem_limit,
        ),
        cost_estimate=cost,
    )(state, w1, b1, w2, b2, w3, b3)


def init_bail_params(key, state_dim, action_dim, hidden_dim=128):
    """PyTorch-Linear-style init U(-1/sqrt(fan_in), 1/sqrt(fan_in)).

    Weights are stored already transposed to (in_features, out_features) and
    pre-cast to bf16 (MXU operand dtype); biases stay f32 (1, out_features)
    rows. This hoists the per-call casts out of the forward path.
    """
    def linear(k, fan_in, fan_out):
        kw, kb = jax.random.split(k)
        bound = 1.0 / jnp.sqrt(jnp.float32(fan_in))
        w = jax.random.uniform(kw, (fan_in, fan_out), jnp.float32, -bound, bound)
        b = jax.random.uniform(kb, (1, fan_out), jnp.float32, -bound, bound)
        return w.astype(jnp.bfloat16), b

    k1, k2, k3 = jax.random.split(key, 3)
    w1, b1 = linear(k1, state_dim, hidden_dim)
    w2, b2 = linear(k2, hidden_dim, hidden_dim)
    w3, b3 = linear(k3, hidden_dim, action_dim)
    return {"w1": w1, "b1": b1, "w2": w2, "b2": b2, "w3": w3, "b3": b3}


def bail_forward_ref(state, p):
    """Pure-f32 reference of the PyTorch forward (bf16 weights cast up exactly)."""
    w1 = p["w1"].astype(jnp.float32)
    w2 = p["w2"].astype(jnp.float32)
    w3 = p["w3"].astype(jnp.float32)
    h = jnp.maximum(state @ w1 + p["b1"], 0.0)
    h = jnp.maximum(h @ w2 + p["b2"], 0.0)
    return jnp.tanh(h @ w3 + p["b3"])


if __name__ == "__main__":
    # TODO(synk): MSELoss / train() and take_action() host glue are not part of
    # the forward pass and are left to the caller.
    key = jax.random.PRNGKey(0)
    k_param, k_state = jax.random.split(key)

    batch, state_dim, action_dim, hidden_dim = 8, 16, 8, 32
    params = init_bail_params(k_param, state_dim, action_dim, hidden_dim)
    state = jax.random.normal(k_state, (batch, state_dim), jnp.float32)

    out = bail_forward(state, params)
    out = jax.block_until_ready(out)

    ref = bail_forward_ref(state, params)
    assert out.shape == (batch, action_dim)
    # bf16 MXU activations with f32 accumulation -> relaxed tolerance vs f32 ref.
    assert jnp.allclose(out, ref, atol=2e-2, rtol=2e-2), (
        float(jnp.max(jnp.abs(out - ref))))

    print("KERNEL_OK")
</pallas_src>

<mosaic_0001>
module attributes {stable_mosaic.version = 11 : i64} {
  func.func @bail_mlp_kernel(%arg0: i32, %arg1: memref<8x16xf32, #tpu.memory_space<vmem>>, %arg2: memref<16x32xbf16, #tpu.memory_space<vmem>>, %arg3: memref<1x32xf32, #tpu.memory_space<vmem>>, %arg4: memref<32x32xbf16, #tpu.memory_space<vmem>>, %arg5: memref<1x32xf32, #tpu.memory_space<vmem>>, %arg6: memref<32x8xbf16, #tpu.memory_space<vmem>>, %arg7: memref<1x8xf32, #tpu.memory_space<vmem>>, %arg8: memref<8x8xf32, #tpu.memory_space<vmem>>) attributes {dimension_semantics = [#tpu.dimension_semantics<parallel>], iteration_bounds = array<i64: 1>, scalar_prefetch = 0 : i64, scratch_operands = 0 : i64, tpu.core_type = #tpu.core_type<tc>, window_params = [{transform_indices = @transform_0, window_bounds = array<i64: 8, 16>}, {pipeline_mode = #tpu.pipeline_mode<synchronous>, transform_indices = @transform_1, window_bounds = array<i64: 16, 32>}, {pipeline_mode = #tpu.pipeline_mode<synchronous>, transform_indices = @transform_2, window_bounds = array<i64: 1, 32>}, {pipeline_mode = #tpu.pipeline_mode<synchronous>, transform_indices = @transform_3, window_bounds = array<i64: 32, 32>}, {pipeline_mode = #tpu.pipeline_mode<synchronous>, transform_indices = @transform_4, window_bounds = array<i64: 1, 32>}, {pipeline_mode = #tpu.pipeline_mode<synchronous>, transform_indices = @transform_5, window_bounds = array<i64: 32, 8>}, {pipeline_mode = #tpu.pipeline_mode<synchronous>, transform_indices = @transform_6, window_bounds = array<i64: 1, 8>}, {transform_indices = @transform_7, window_bounds = array<i64: 8, 8>}]} {
    %c0 = arith.constant 0 : index
    %c0_0 = arith.constant 0 : index
    %0 = vector.load %arg1[%c0, %c0_0] : memref<8x16xf32, #tpu.memory_space<vmem>>, vector<8x16xf32>
    %1 = arith.truncf %0 : vector<8x16xf32> to vector<8x16xbf16>
    %c0_1 = arith.constant 0 : index
    %c0_2 = arith.constant 0 : index
    %2 = vector.load %arg2[%c0_1, %c0_2] : memref<16x32xbf16, #tpu.memory_space<vmem>>, vector<16x32xbf16>
    %cst = arith.constant dense<0.000000e+00> : vector<8x32xf32>
    %3 = tpu.matmul %1, %2, %cst {dimension_numbers = #tpu.dot_dimension_numbers<[1], [0], [0], [1], [0, 0, 1, 1], [], []>} : vector<8x16xbf16>, vector<16x32xbf16>, vector<8x32xf32> -> vector<8x32xf32>
    %c0_3 = arith.constant 0 : index
    %c0_4 = arith.constant 0 : index
    %4 = vector.load %arg3[%c0_3, %c0_4] : memref<1x32xf32, #tpu.memory_space<vmem>>, vector<1x32xf32>
    %5 = vector.broadcast %4 : vector<1x32xf32> to vector<8x32xf32>
    %6 = arith.addf %3, %5 : vector<8x32xf32>
    %cst_5 = arith.constant 0.000000e+00 : f32
    %7 = vector.broadcast %cst_5 : f32 to vector<8x32xf32>
    %8 = arith.maximumf %6, %7 : vector<8x32xf32>
    %9 = arith.truncf %8 : vector<8x32xf32> to vector<8x32xbf16>
    %c0_6 = arith.constant 0 : index
    %c0_7 = arith.constant 0 : index
    %10 = vector.load %arg4[%c0_6, %c0_7] : memref<32x32xbf16, #tpu.memory_space<vmem>>, vector<32x32xbf16>
    %cst_8 = arith.constant dense<0.000000e+00> : vector<8x32xf32>
    %11 = tpu.matmul %9, %10, %cst_8 {dimension_numbers = #tpu.dot_dimension_numbers<[1], [0], [0], [1], [0, 0, 1, 1], [], []>} : vector<8x32xbf16>, vector<32x32xbf16>, vector<8x32xf32> -> vector<8x32xf32>
    %c0_9 = arith.constant 0 : index
    %c0_10 = arith.constant 0 : index
    %12 = vector.load %arg5[%c0_9, %c0_10] : memref<1x32xf32, #tpu.memory_space<vmem>>, vector<1x32xf32>
    %13 = vector.broadcast %12 : vector<1x32xf32> to vector<8x32xf32>
    %14 = arith.addf %11, %13 : vector<8x32xf32>
    %cst_11 = arith.constant 0.000000e+00 : f32
    %15 = vector.broadcast %cst_11 : f32 to vector<8x32xf32>
    %16 = arith.maximumf %14, %15 : vector<8x32xf32>
    %17 = arith.truncf %16 : vector<8x32xf32> to vector<8x32xbf16>
    %c0_12 = arith.constant 0 : index
    %c0_13 = arith.constant 0 : index
    %18 = vector.load %arg6[%c0_12, %c0_13] : memref<32x8xbf16, #tpu.memory_space<vmem>>, vector<32x8xbf16>
    %cst_14 = arith.constant dense<0.000000e+00> : vector<8x8xf32>
    %19 = tpu.matmul %17, %18, %cst_14 {dimension_numbers = #tpu.dot_dimension_numbers<[1], [0], [0], [1], [0, 0, 1, 1], [], []>} : vector<8x32xbf16>, vector<32x8xbf16>, vector<8x8xf32> -> vector<8x8xf32>
    %c0_15 = arith.constant 0 : index
    %c0_16 = arith.constant 0 : index
    %20 = vector.load %arg7[%c0_15, %c0_16] : memref<1x8xf32, #tpu.memory_space<vmem>>, vector<1x8xf32>
    %21 = vector.broadcast %20 : vector<1x8xf32> to vector<8x8xf32>
    %22 = arith.addf %19, %21 : vector<8x8xf32>
    %23 = math.tanh %22 : vector<8x8xf32>
    %c0_17 = arith.constant 0 : index
    %c0_18 = arith.constant 0 : index
    %24 = vector.load %arg8[%c0_17, %c0_18] : memref<8x8xf32, #tpu.memory_space<vmem>>, vector<8x8xf32>
    tpu.vector_store %arg8[%c0_17, %c0_18], %23 {strides = array<i32>} : memref<8x8xf32, #tpu.memory_space<vmem>>, vector<8x8xf32>,
    return
  }
  func.func @transform_0(%arg0: i32) -> (i32, i32) {
    %c0_i32 = arith.constant 0 : i32
    %c0_i32_0 = arith.constant 0 : i32
    return %arg0, %c0_i32 : i32, i32
  }
  func.func @transform_1(%arg0: i32) -> (i32, i32) {
    %c0_i32 = arith.constant 0 : i32
    %c0_i32_0 = arith.constant 0 : i32
    %c0_i32_1 = arith.constant 0 : i32
    return %c0_i32, %c0_i32_0 : i32, i32
  }
  func.func @transform_2(%arg0: i32) -> (i32, i32) {
    %c0_i32 = arith.constant 0 : i32
    %c0_i32_0 = arith.constant 0 : i32
    %c0_i32_1 = arith.constant 0 : i32
    return %c0_i32, %c0_i32_0 : i32, i32
  }
  func.func @transform_3(%arg0: i32) -> (i32, i32) {
    %c0_i32 = arith.constant 0 : i32
    %c0_i32_0 = arith.constant 0 : i32
    %c0_i32_1 = arith.constant 0 : i32
    return %c0_i32, %c0_i32_0 : i32, i32
  }
  func.func @transform_4(%arg0: i32) -> (i32, i32) {
    %c0_i32 = arith.constant 0 : i32
    %c0_i32_0 = arith.constant 0 : i32
    %c0_i32_1 = arith.constant 0 : i32
    return %c0_i32, %c0_i32_0 : i32, i32
  }
  func.func @transform_5(%arg0: i32) -> (i32, i32) {
    %c0_i32 = arith.constant 0 : i32
    %c0_i32_0 = arith.constant 0 : i32
    %c0_i32_1 = arith.constant 0 : i32
    return %c0_i32, %c0_i32_0 : i32, i32
  }
  func.func @transform_6(%arg0: i32) -> (i32, i32) {
    %c0_i32 = arith.constant 0 : i32
    %c0_i32_0 = arith.constant 0 : i32
    %c0_i32_1 = arith.constant 0 : i32
    return %c0_i32, %c0_i32_0 : i32, i32
  }
  func.func @transform_7(%arg0: i32) -> (i32, i32) {
    %c0_i32 = arith.constant 0 : i32
    %c0_i32_0 = arith.constant 0 : i32
    return %arg0, %c0_i32 : i32, i32
  }
}

</mosaic_0001>

<llo_original>
// kernel: tpu_custom_call.1
$region0: #{tpu_custom_call.1}
  #allocation0 [shape = 'u32[]', space=smem, size = 0x4, offset = 0x4, fixed_abs, tag = 'smem constant byte address 0x4 - core index']
  #allocation1 [shape = 'u32[72,128]{1,0:T(1,128)}', space=vmem, size = 0x9000, scoped, tag = 'internal scratch']
  %s0 = inlined_call_operand.hbm [shape: f32[8,16], index: 0, kind: input, shape index: {}]
  %s1 = inlined_call_operand.hbm [shape: bf16[16,32], index: 1, kind: input, shape index: {}]
  %s2 = inlined_call_operand.vmem [shape: f32[1,32], index: 2, kind: input, shape index: {}]
  %s3 = inlined_call_operand.vmem [shape: bf16[32,32], index: 3, kind: input, shape index: {}]
  %s4 = inlined_call_operand.vmem [shape: f32[1,32], index: 4, kind: input, shape index: {}]
  %s5 = inlined_call_operand.vmem [shape: bf16[32,8], index: 5, kind: input, shape index: {}]
  %s6 = inlined_call_operand.vmem [shape: f32[1,8], index: 6, kind: input, shape index: {}]
  %s7 = inlined_call_operand.hbm [shape: f32[8,8], index: 7, kind: output, shape index: {}]
  %s8 = sld [smem:[#allocation0]]
  $region46: #{tpu_custom_call.1} parent=0
    _
  %s10 = ssub.s32 1, %s8
  %s11 = scalar_select 0, %s10, %s8
  $region1: #{tpu_custom_call.1} parent=0
    #allocation2 [shape = 'u8[4096]{0}', space=vmem, size = 0x1000, scoped, tag = 'input window, operand 0, single buffered']
    #allocation3 [shape = 's32[1]{0}', space=sflag, size = 0x4, scoped, tag = 'scoped memory for tpu_custom_call.1']
    #allocation4 [shape = 's32[1]{0}', space=sflag, size = 0x4, scoped, tag = 'scoped memory for tpu_custom_call.1']
    #allocation5 [shape = 'u8[4096]{0}', space=vmem, size = 0x1000, scoped, tag = 'input window, operand 1, single buffered']
    #allocation6 [shape = 's32[1]{0}', space=sflag, size = 0x4, scoped, tag = 'scoped memory for tpu_custom_call.1']
    #allocation7 [shape = 'u8[4096]{0}', space=vmem, size = 0x1000, scoped, tag = 'output window, operand 0, single buffered']
    %12 = vsyncpa [#allocation3], 0
    %13 = vsyncpa [#allocation6], 0
    %14 = vsyncpa [#allocation4], 0
    // Predicated region
    $region2: #{tpu_custom_call.1} parent=1 // pred_check
      _
    $region3: #{tpu_custom_call.1} parent=1 // pred_check_branch
      %16 = sbr.rel (0) target = $region5
    $region4: #{tpu_custom_call.1} parent=1 // pred_region
      %18 = vsyncadd [#allocation3], 0
      %s20 = sshll.u32 %s0, 4
      %s21 = int_to_ptr.hbm [resolvable:$true] %s20
      %s22 = sshll.u32 [#allocation2], 4
      %s23 = int_to_ptr.vmem [resolvable:$true] %s22
      %25 = dma.hbm_to_vmem [thread:$0]  %s21, 128, %s23, [#allocation3]
    $region5: #{tpu_custom_call.1} parent=1 // pred_fallthru
      _
    // Predicated region
    $region6: #{tpu_custom_call.1} parent=1 // pred_check
      _
    $region7: #{tpu_custom_call.1} parent=1 // pred_check_branch
      %27 = sbr.rel (0) target = $region9
    $region8: #{tpu_custom_call.1} parent=1 // pred_region
      %29 = vsyncadd [#allocation6], 0
      %s30 = sshll.u32 %s1, 4
      %s31 = int_to_ptr.hbm [resolvable:$true] %s30
      %s32 = sshll.u32 [#allocation5], 4
      %s33 = int_to_ptr.vmem [resolvable:$true] %s32
      %38 = dma.hbm_to_vmem [thread:$0]  %s31, 128, %s33, [#allocation6], 64, 64, 4
    $region9: #{tpu_custom_call.1} parent=1 // pred_fallthru
      _
    // Predicated region
    $region10: #{tpu_custom_call.1} parent=1 // pred_check
      _
    $region11: #{tpu_custom_call.1} parent=1 // pred_check_branch
      %40 = sbr.rel (0) target = $region13
    $region12: #{tpu_custom_call.1} parent=1 // pred_region
      _
    $region13: #{tpu_custom_call.1} parent=1 // pred_fallthru
      _
    // Predicated region
    $region14: #{tpu_custom_call.1} parent=1 // pred_check
      _
    $region15: #{tpu_custom_call.1} parent=1 // pred_check_branch
      %42 = sbr.rel (0) target = $region17
    $region16: #{tpu_custom_call.1} parent=1 // pred_region
      _
    $region17: #{tpu_custom_call.1} parent=1 // pred_fallthru
      _
    // Predicated region
    $region18: #{tpu_custom_call.1} parent=1 // pred_check
      _
    $region19: #{tpu_custom_call.1} parent=1 // pred_check_branch
      %44 = sbr.rel (0) target = $region21
    $region20: #{tpu_custom_call.1} parent=1 // pred_region
      _
    $region21: #{tpu_custom_call.1} parent=1 // pred_fallthru
      _
    // Predicated region
    $region22: #{tpu_custom_call.1} parent=1 // pred_check
      _
    $region23: #{tpu_custom_call.1} parent=1 // pred_check_branch
      %46 = sbr.rel (0) target = $region25
    $region24: #{tpu_custom_call.1} parent=1 // pred_region
      _
    $region25: #{tpu_custom_call.1} parent=1 // pred_fallthru
      _
    // Predicated region
    $region26: #{tpu_custom_call.1} parent=1 // pred_check
      _
    $region27: #{tpu_custom_call.1} parent=1 // pred_check_branch
      %48 = sbr.rel (0) target = $region29
    $region28: #{tpu_custom_call.1} parent=1 // pred_region
      _
    $region29: #{tpu_custom_call.1} parent=1 // pred_fallthru
      _
    // Predicated region
    $region30: #{tpu_custom_call.1} parent=1 // pred_check
      _
    $region31: #{tpu_custom_call.1} parent=1 // pred_check_branch
      %50 = sbr.rel (0) target = $region33
    $region32: #{tpu_custom_call.1} parent=1 // pred_region
      %52 = dma.done [#allocation3], 128
    $region33: #{tpu_custom_call.1} parent=1 // pred_fallthru
      _
    // Predicated region
    $region34: #{tpu_custom_call.1} parent=1 // pred_check
      _
    $region35: #{tpu_custom_call.1} parent=1 // pred_check_branch
      %54 = sbr.rel (0) target = $region37
    $region36: #{tpu_custom_call.1} parent=1 // pred_region
      %56 = dma.done [#allocation6], 128
    $region37: #{tpu_custom_call.1} parent=1 // pred_fallthru
      _
    %v58 = vld [vmem:[#allocation2] sm:$0xff]
    %v59 = vpack.c.bf16 %v58, %v58
    %v60 = vld [vmem:[#allocation5] sm:$0xf]
    %v61 = vld [vmem:[#allocation5 + $0x4] sm:$0xf]
    %v62 = vld [vmem:[%s2] sm:$0x1]
    %v64 = vperm.slane %v62, 0
    %v68 = vunpack.c.l.b16 %v60
    %v69 = vunpack.c.l.b16 %v61
    %v70 = vpack.c.b16 %v69, %v68
    %vm72 = vcmask 130048
    %v74 = vsel %vm72, %v59, 0
    %76 = vmatpush.bf16.msra.mxu0 0
    %77 = vmatpush.bf16.msra.mxu0 0
    %78 = vmatpush.bf16.msra.mxu0 0
    %79 = vmatpush.bf16.msra.mxu0 0
    %80 = vmatpush.bf16.msra.mxu0 0
    %81 = vmatpush.bf16.msra.mxu0 0
    %82 = vmatpush.bf16.msra.mxu0 0
    %83 = vmatpush.bf16.msra.mxu0 %v70
    %84 = vmatmul.bf16.gmra.mxu0 %v74
    %v85 = vpop.f32.mrf.mxu0
    %v86 = vadd.f32 %v64, %v85
    %v87 = vpop.f32.mrf.mxu0
    %88 = vdwg.mxu0
    %v89 = vmax.f32 %v86, 0.0
    %v90 = vpack.c.bf16 %v89, %v89
    %v91 = vld [vmem:[%s3] sm:$0xf]
    %v92 = vld [vmem:[%s3 + $0x4] sm:$0xf]
    %v93 = vld [vmem:[%s3 + $0x8] sm:$0xf]
    %v94 = vld [vmem:[%s3 + $0xc] sm:$0xf]
    %v95 = vld [vmem:[%s4] sm:$0x1]
    %v97 = vperm.slane %v95, 0
    %v103 = vunpack.c.l.b16 %v91
    %v104 = vunpack.c.l.b16 %v92
    %v105 = vunpack.c.l.b16 %v93
    %v106 = vunpack.c.l.b16 %v94
    %v107 = vpack.c.b16 %v104, %v103
    %v108 = vpack.c.b16 %v106, %v105
    %vm111 = vcmask 261120
    %v113 = vsel %vm111, %v90, 0
    %115 = vmatpush.bf16.msra.mxu0 0
    %116 = vmatpush.bf16.msra.mxu0 0
    %117 = vmatpush.bf16.msra.mxu0 0
    %118 = vmatpush.bf16.msra.mxu0 0
    %119 = vmatpush.bf16.msra.mxu0 0
    %120 = vmatpush.bf16.msra.mxu0 0
    %121 = vmatpush.bf16.msra.mxu0 %v108
    %122 = vmatpush.bf16.msra.mxu0 %v107
    %123 = vmatmul.bf16.gmra.mxu0 %v113
    %v124 = vpop.f32.mrf.mxu0
    %v125 = vadd.f32 %v97, %v124
    %v126 = vpop.f32.mrf.mxu0
    %127 = vdwg.mxu0
    %v128 = vmax.f32 %v125, 0.0
    %v129 = vpack.c.bf16 %v128, %v128
    %v130 = vld [vmem:[%s5] sm:$0xf]
    %v131 = vld [vmem:[%s5 + $0x4] sm:$0xf]
    %v132 = vld [vmem:[%s5 + $0x8] sm:$0xf]
    %v133 = vld [vmem:[%s5 + $0xc] sm:$0xf]
    %v134 = vld [vmem:[%s6] sm:$0x1]
    %v136 = vperm.slane %v134, 0
    %v142 = vunpack.c.l.b16 %v130
    %v143 = vunpack.c.l.b16 %v131
    %v144 = vunpack.c.l.b16 %v132
    %v145 = vunpack.c.l.b16 %v133
    %v146 = vpack.c.b16 %v143, %v142
    %v147 = vpack.c.b16 %v145, %v144
    %v151 = vsel %vm111, %v129, 0
    %153 = vmatpush.bf16.msra.mxu0 0
    %154 = vmatpush.bf16.msra.mxu0 0
    %155 = vmatpush.bf16.msra.mxu0 0
    %156 = vmatpush.bf16.msra.mxu0 0
    %157 = vmatpush.bf16.msra.mxu0 0
    %158 = vmatpush.bf16.msra.mxu0 0
    %159 = vmatpush.bf16.msra.mxu0 %v147
    %160 = vmatpush.bf16.msra.mxu0 %v146
    %161 = vmatmul.bf16.gmra.mxu0 %v151
    %v162 = vpop.f32.mrf.mxu0
    %v163 = vadd.f32 %v136, %v162
    %v164 = vpop.f32.mrf.mxu0
    %165 = vdwg.mxu0
    %v166 = vtanh.pop %v163
    %vm167 = vcmask 64512
    %168 = vst.msk [vmem:[#allocation7] sm:$0xff] %vm167, %v166
    // Predicated region
    $region38: #{tpu_custom_call.1} parent=1 // pred_check
      _
    $region39: #{tpu_custom_call.1} parent=1 // pred_check_branch
      %170 = sbr.rel (0) target = $region41
    $region40: #{tpu_custom_call.1} parent=1 // pred_region
      %172 = vsyncadd [#allocation4], 0
      %s174 = sshll.u32 [#allocation7], 4
      %s175 = int_to_ptr.vmem [resolvable:$true] %s174
      %s176 = sshll.u32 %s7, 4
      %s177 = int_to_ptr.hbm [resolvable:$true] %s176
      %179 = dma.vmem_to_hbm [thread:$0]  %s175, 128, %s177, [#allocation4]
    $region41: #{tpu_custom_call.1} parent=1 // pred_fallthru
      _
    // Predicated region
    $region42: #{tpu_custom_call.1} parent=1 // pred_check
      _
    $region43: #{tpu_custom_call.1} parent=1 // pred_check_branch
      %181 = sbr.rel (0) target = $region45
    $region44: #{tpu_custom_call.1} parent=1 // pred_region
      %183 = dma.done [#allocation4], 128
    $region45: #{tpu_custom_call.1} parent=1 // pred_fallthru
      _
    %184 = vsyncpa [#allocation3], 1
    %185 = vsyncpa [#allocation6], 1
    %186 = vsyncpa [#allocation4], 1

</llo_original>
